<compile_context>
chip_gen: v6e
topology: v6e:2x2x1
jax: 0.10.0
libtpu: 0.0.40
codegen_flags: <defaults>
</compile_context>

<pallas_src>
import functools

import jax
import jax.numpy as jnp
from jax.experimental import pallas as pl
from jax.experimental.pallas import tpu as pltpu

LANE = 128
SUBLANE = 8


def _round_up(x, m):
    return (x + m - 1) // m * m


# ---------------------------------------------------------------------------
# Fused MLP kernel: z1 = x@W1 + b1; [dropout]; h = relu(z1);
#                   z2 = h@W2 + b2; out = softmax(z2) over the valid classes.
# ---------------------------------------------------------------------------
def _mlp_kernel(seed_ref, x_ref, w1_ref, b1_ref, w2_ref, b2_ref, o_ref,
                *, dim_out, dropout_rate, apply_dropout):
    # x_ref: (tm, Dp) bf16 | w1_ref: (Dp, Hp) bf16 | b1_ref: (1, Hp) f32
    # w2_ref: (Hp, Op) bf16 | b2_ref: (1, Op) f32  | o_ref: (tm, Op) f32
    z1 = jnp.dot(x_ref[...], w1_ref[...], preferred_element_type=jnp.float32)
    z1 = z1 + b1_ref[...]

    if apply_dropout:
        # Unique seed per grid step so every M-tile gets an independent mask.
        pltpu.prng_seed(seed_ref[0] + pl.program_id(0))
        bits = pltpu.bitcast(pltpu.prng_random_bits(z1.shape), jnp.uint32)
        keep_prob = 1.0 - dropout_rate
        threshold = jnp.uint32(min(int(keep_prob * (2 ** 32)), 2 ** 32 - 1))
        keep = bits < threshold
        z1 = jnp.where(keep, z1 * (1.0 / keep_prob), 0.0)

    h = jnp.maximum(z1, 0.0)

    z2 = jnp.dot(h.astype(w2_ref.dtype), w2_ref[...],
                 preferred_element_type=jnp.float32)
    z2 = z2 + b2_ref[...]

    # Softmax over the first `dim_out` columns; padded columns -> prob 0.
    col = jax.lax.broadcasted_iota(jnp.int32, z2.shape, dimension=1)
    z2 = jnp.where(col < dim_out, z2, -jnp.inf)
    m = jnp.max(z2, axis=1, keepdims=True)
    e = jnp.exp(z2 - m)
    s = jnp.sum(e, axis=1, keepdims=True)
    o_ref[...] = (e / s).astype(o_ref.dtype)


# ---------------------------------------------------------------------------
# One-time parameter preparation (transpose to (in, out), zero-pad, cast bf16).
# ---------------------------------------------------------------------------
def prepare_params(params, compute_dtype=jnp.bfloat16):
    w1, b1 = params["w1"], params["b1"]        # PyTorch layout: (H, D), (H,)
    w2, b2 = params["w2"], params["b2"]        # PyTorch layout: (O, H), (O,)
    H, D = w1.shape
    O, H2 = w2.shape
    assert H == H2

    Dp = _round_up(D, LANE)
    Hp = _round_up(H, LANE)
    Op = _round_up(O, LANE)

    w1p = jnp.zeros((Dp, Hp), compute_dtype).at[:D, :H].set(w1.T.astype(compute_dtype))
    b1p = jnp.zeros((1, Hp), jnp.float32).at[0, :H].set(b1.astype(jnp.float32))
    w2p = jnp.zeros((Hp, Op), compute_dtype).at[:H, :O].set(w2.T.astype(compute_dtype))
    b2p = jnp.zeros((1, Op), jnp.float32).at[0, :O].set(b2.astype(jnp.float32))

    return {"w1": w1p, "b1": b1p, "w2": w2p, "b2": b2p,
            "dim_in": D, "dim_hidden": H, "dim_out": O}


# ---------------------------------------------------------------------------
# Forward pass
# ---------------------------------------------------------------------------
def mlp_forward(x, prepped, *, seed=0, train=False, dropout_rate=0.5,
                block_m=256):
    D, O = prepped["dim_in"], prepped["dim_out"]
    Dp, Hp = prepped["w1"].shape
    Op = prepped["w2"].shape[1]

    # x.view(-1, C*H*W)
    x2 = x.reshape(-1, D)
    M = x2.shape[0]

    # M tiling: sublane-aligned tiles; pad the batch up to a tile multiple.
    tm = min(block_m, _round_up(M, SUBLANE))
    Mp = _round_up(M, tm)

    xp = jnp.zeros((Mp, Dp), jnp.bfloat16).at[:M, :D].set(x2.astype(jnp.bfloat16))
    seed_arr = jnp.asarray([seed], dtype=jnp.int32)

    kernel = functools.partial(
        _mlp_kernel,
        dim_out=O,
        dropout_rate=float(dropout_rate),
        apply_dropout=bool(train) and dropout_rate > 0.0,
    )

    out = pl.pallas_call(
        kernel,
        out_shape=jax.ShapeDtypeStruct((Mp, Op), jnp.float32),
        grid=(Mp // tm,),
        in_specs=[
            pl.BlockSpec(memory_space=pltpu.MemorySpace.SMEM),     # seed (scalar)
            pl.BlockSpec((tm, Dp), lambda i: (i, 0)),              # x tile
            pl.BlockSpec((Dp, Hp), lambda i: (0, 0)),              # W1 (resident)
            pl.BlockSpec((1, Hp), lambda i: (0, 0)),               # b1
            pl.BlockSpec((Hp, Op), lambda i: (0, 0)),              # W2 (resident)
            pl.BlockSpec((1, Op), lambda i: (0, 0)),               # b2
        ],
        out_specs=pl.BlockSpec((tm, Op), lambda i: (i, 0)),
        compiler_params=pltpu.CompilerParams(
            dimension_semantics=("parallel",),
        ),
    )(seed_arr, xp, prepped["w1"], prepped["b1"], prepped["w2"], prepped["b2"])

    return out[:M, :O]


# ---------------------------------------------------------------------------
# Parameter init (PyTorch nn.Linear default: U(-1/sqrt(fan_in), 1/sqrt(fan_in)))
# ---------------------------------------------------------------------------
def init_params(key, dim_in, dim_hidden=64, dim_out=10):
    def uni(k, shape, fan_in):
        bound = 1.0 / jnp.sqrt(jnp.float32(fan_in))
        return jax.random.uniform(k, shape, jnp.float32, -bound, bound)

    k1, k2, k3, k4 = jax.random.split(key, 4)
    return {
        "w1": uni(k1, (dim_hidden, dim_in), dim_in),
        "b1": uni(k2, (dim_hidden,), dim_in),
        "w2": uni(k3, (dim_out, dim_hidden), dim_hidden),
        "b2": uni(k4, (dim_out,), dim_hidden),
    }


# ---------------------------------------------------------------------------
# Main
# ---------------------------------------------------------------------------
if __name__ == "__main__":
    key = jax.random.PRNGKey(0)
    k_param, k_x = jax.random.split(key)

    B, C, H, W = 2, 4, 16, 16
    dim_in = C * H * W                       # 1024
    dim_hidden, dim_out = 64, 10

    params = init_params(k_param, dim_in, dim_hidden, dim_out)
    prepped = prepare_params(params)

    x = jax.random.normal(k_x, (B, C, H, W), dtype=jnp.float32)

    fwd = jax.jit(lambda xx: mlp_forward(xx, prepped, train=False))
    out = jax.block_until_ready(fwd(x))

    assert out.shape == (B, dim_out), out.shape

    # Softmax rows must sum to 1.
    row_sums = out.sum(axis=1)
    assert bool(jnp.allclose(row_sums, 1.0, atol=1e-4)), row_sums

    # Cross-check against a pure-JAX f32 reference (eval-mode dropout = identity).
    x2 = x.reshape(-1, dim_in)
    ref = jax.nn.softmax(
        jnp.maximum(x2 @ params["w1"].T + params["b1"], 0.0) @ params["w2"].T
        + params["b2"],
        axis=1,
    )
    assert bool(jnp.allclose(out, ref, atol=3e-2)), jnp.max(jnp.abs(out - ref))

    print("KERNEL_OK")
</pallas_src>

<mosaic_0001>
module attributes {stable_mosaic.version = 11 : i64} {
  func.func @_mlp_kernel(%arg0: i32, %arg1: memref<1xi32, #tpu.memory_space<smem>>, %arg2: memref<8x1024xbf16, #tpu.memory_space<vmem>>, %arg3: memref<1024x128xbf16, #tpu.memory_space<vmem>>, %arg4: memref<1x128xf32, #tpu.memory_space<vmem>>, %arg5: memref<128x128xbf16, #tpu.memory_space<vmem>>, %arg6: memref<1x128xf32, #tpu.memory_space<vmem>>, %arg7: memref<8x128xf32, #tpu.memory_space<vmem>>) attributes {dimension_semantics = [#tpu.dimension_semantics<parallel>], iteration_bounds = array<i64: 1>, scalar_prefetch = 0 : i64, scratch_operands = 0 : i64, tpu.core_type = #tpu.core_type<tc>, window_params = [{transform_indices = @transform_0, window_bounds = array<i64: 1>}, {transform_indices = @transform_1, window_bounds = array<i64: 8, 1024>}, {pipeline_mode = #tpu.pipeline_mode<synchronous>, transform_indices = @transform_2, window_bounds = array<i64: 1024, 128>}, {pipeline_mode = #tpu.pipeline_mode<synchronous>, transform_indices = @transform_3, window_bounds = array<i64: 1, 128>}, {pipeline_mode = #tpu.pipeline_mode<synchronous>, transform_indices = @transform_4, window_bounds = array<i64: 128, 128>}, {pipeline_mode = #tpu.pipeline_mode<synchronous>, transform_indices = @transform_5, window_bounds = array<i64: 1, 128>}, {transform_indices = @transform_6, window_bounds = array<i64: 8, 128>}]} {
    %c0 = arith.constant 0 : index
    %c0_0 = arith.constant 0 : index
    %0 = vector.load %arg2[%c0, %c0_0] : memref<8x1024xbf16, #tpu.memory_space<vmem>>, vector<8x1024xbf16>
    %c0_1 = arith.constant 0 : index
    %c0_2 = arith.constant 0 : index
    %1 = vector.load %arg3[%c0_1, %c0_2] : memref<1024x128xbf16, #tpu.memory_space<vmem>>, vector<1024x128xbf16>
    %cst = arith.constant dense<0.000000e+00> : vector<8x128xf32>
    %2 = tpu.matmul %0, %1, %cst {dimension_numbers = #tpu.dot_dimension_numbers<[1], [0], [0], [1], [0, 0, 1, 1], [], []>} : vector<8x1024xbf16>, vector<1024x128xbf16>, vector<8x128xf32> -> vector<8x128xf32>
    %c0_3 = arith.constant 0 : index
    %c0_4 = arith.constant 0 : index
    %3 = vector.load %arg4[%c0_3, %c0_4] : memref<1x128xf32, #tpu.memory_space<vmem>>, vector<1x128xf32>
    %4 = vector.broadcast %3 : vector<1x128xf32> to vector<8x128xf32>
    %5 = arith.addf %2, %4 : vector<8x128xf32>
    %cst_5 = arith.constant 0.000000e+00 : f32
    %6 = vector.broadcast %cst_5 : f32 to vector<8x128xf32>
    %7 = arith.maximumf %5, %6 : vector<8x128xf32>
    %8 = arith.truncf %7 : vector<8x128xf32> to vector<8x128xbf16>
    %c0_6 = arith.constant 0 : index
    %c0_7 = arith.constant 0 : index
    %9 = vector.load %arg5[%c0_6, %c0_7] : memref<128x128xbf16, #tpu.memory_space<vmem>>, vector<128x128xbf16>
    %cst_8 = arith.constant dense<0.000000e+00> : vector<8x128xf32>
    %10 = tpu.matmul %8, %9, %cst_8 {dimension_numbers = #tpu.dot_dimension_numbers<[1], [0], [0], [1], [0, 0, 1, 1], [], []>} : vector<8x128xbf16>, vector<128x128xbf16>, vector<8x128xf32> -> vector<8x128xf32>
    %c0_9 = arith.constant 0 : index
    %c0_10 = arith.constant 0 : index
    %11 = vector.load %arg6[%c0_9, %c0_10] : memref<1x128xf32, #tpu.memory_space<vmem>>, vector<1x128xf32>
    %12 = vector.broadcast %11 : vector<1x128xf32> to vector<8x128xf32>
    %13 = arith.addf %10, %12 : vector<8x128xf32>
    %14 = tpu.iota {dimensions = array<i32: 1>} : vector<8x128xi32>
    %c10_i32 = arith.constant 10 : i32
    %15 = vector.broadcast %c10_i32 : i32 to vector<8x128xi32>
    %16 = arith.cmpi slt, %14, %15 : vector<8x128xi32>
    %cst_11 = arith.constant 0xFF800000 : f32
    %17 = vector.broadcast %cst_11 : f32 to vector<8x128xf32>
    %18 = arith.select %16, %13, %17 : vector<8x128xi1>, vector<8x128xf32>
    %cst_12 = arith.constant dense<0xFF800000> : vector<8xf32>
    %19 = vector.multi_reduction <maximumf>, %18, %cst_12 [1] : vector<8x128xf32> to vector<8xf32>
    %20 = vector.shape_cast %19 : vector<8xf32> to vector<8x1xf32>
    %21 = vector.broadcast %20 : vector<8x1xf32> to vector<8x128xf32>
    %22 = arith.subf %18, %21 : vector<8x128xf32>
    %23 = math.exp %22 : vector<8x128xf32>
    %cst_13 = arith.constant dense<0.000000e+00> : vector<8xf32>
    %24 = vector.multi_reduction <add>, %23, %cst_13 [1] : vector<8x128xf32> to vector<8xf32>
    %25 = vector.shape_cast %24 : vector<8xf32> to vector<8x1xf32>
    %26 = vector.broadcast %25 : vector<8x1xf32> to vector<8x128xf32>
    %27 = arith.divf %23, %26 : vector<8x128xf32>
    %c0_14 = arith.constant 0 : index
    %c0_15 = arith.constant 0 : index
    %28 = vector.load %arg7[%c0_14, %c0_15] : memref<8x128xf32, #tpu.memory_space<vmem>>, vector<8x128xf32>
    tpu.vector_store %arg7[%c0_14, %c0_15], %27 {strides = array<i32>} : memref<8x128xf32, #tpu.memory_space<vmem>>, vector<8x128xf32>,
    return
  }
  func.func @transform_0(%arg0: i32) -> i32 {
    %c0_i32 = arith.constant 0 : i32
    %c0_i32_0 = arith.constant 0 : i32
    return %c0_i32 : i32
  }
  func.func @transform_1(%arg0: i32) -> (i32, i32) {
    %c0_i32 = arith.constant 0 : i32
    %c0_i32_0 = arith.constant 0 : i32
    return %arg0, %c0_i32 : i32, i32
  }
  func.func @transform_2(%arg0: i32) -> (i32, i32) {
    %c0_i32 = arith.constant 0 : i32
    %c0_i32_0 = arith.constant 0 : i32
    %c0_i32_1 = arith.constant 0 : i32
    return %c0_i32, %c0_i32_0 : i32, i32
  }
  func.func @transform_3(%arg0: i32) -> (i32, i32) {
    %c0_i32 = arith.constant 0 : i32
    %c0_i32_0 = arith.constant 0 : i32
    %c0_i32_1 = arith.constant 0 : i32
    return %c0_i32, %c0_i32_0 : i32, i32
  }
  func.func @transform_4(%arg0: i32) -> (i32, i32) {
    %c0_i32 = arith.constant 0 : i32
    %c0_i32_0 = arith.constant 0 : i32
    %c0_i32_1 = arith.constant 0 : i32
    return %c0_i32, %c0_i32_0 : i32, i32
  }
  func.func @transform_5(%arg0: i32) -> (i32, i32) {
    %c0_i32 = arith.constant 0 : i32
    %c0_i32_0 = arith.constant 0 : i32
    %c0_i32_1 = arith.constant 0 : i32
    return %c0_i32, %c0_i32_0 : i32, i32
  }
  func.func @transform_6(%arg0: i32) -> (i32, i32) {
    %c0_i32 = arith.constant 0 : i32
    %c0_i32_0 = arith.constant 0 : i32
    return %arg0, %c0_i32 : i32, i32
  }
}

</mosaic_0001>

<llo_original>
// kernel: _lambda_.1
$region0: #{_lambda_.1}
  #allocation0 [shape = 'u32[]', space=smem, size = 0x4, offset = 0x4, fixed_abs, tag = 'smem constant byte address 0x4 - core index']
  #allocation1 [shape = 'u32[144,128]{1,0:T(1,128)}', space=vmem, size = 0x12000, scoped, tag = 'internal scratch']
  #allocation2 [shape = 's32[1]{0:T(128)S(6)}', space=smem, size = 0x200, scoped, tag = 'scoped memory for _lambda_.1']
  %s0 = inlined_call_operand.<no memory space> [shape: s32[1], index: 0, kind: input, shape index: {}]
  %s1 = inlined_call_operand.vmem [shape: bf16[8,1024], index: 1, kind: input, shape index: {}]
  %s2 = inlined_call_operand.hbm [shape: bf16[1024,128], index: 2, kind: input, shape index: {}]
  %s3 = inlined_call_operand.vmem [shape: f32[1,128], index: 3, kind: input, shape index: {}]
  %s4 = inlined_call_operand.vmem [shape: bf16[128,128], index: 4, kind: input, shape index: {}]
  %s5 = inlined_call_operand.vmem [shape: f32[1,128], index: 5, kind: input, shape index: {}]
  %s6 = inlined_call_operand.vmem [shape: f32[8,128], index: 6, kind: output, shape index: {}]
  %s7 = sld [smem:[#allocation0]]
  $region38: #{_lambda_.1} parent=0
    _
  %s9 = ssub.s32 1, %s7
  %s10 = scalar_select 0, %s9, %s7
  %11 = sst [smem:[#allocation2]] %s0
  $region1: #{_lambda_.1} parent=0
    #allocation3 [shape = 'u8[262144]{0}', space=vmem, size = 0x40000, scoped, tag = 'input window, operand 2, single buffered']
    #allocation4 [shape = 's32[1]{0}', space=sflag, size = 0x4, scoped, tag = 'scoped memory for _lambda_.1']
    %12 = vsyncpa [#allocation4], 0
    // Predicated region
    $region2: #{_lambda_.1} parent=1 // pred_check
      _
    $region3: #{_lambda_.1} parent=1 // pred_check_branch
      %14 = sbr.rel (0) target = $region5
    $region4: #{_lambda_.1} parent=1 // pred_region
      _
    $region5: #{_lambda_.1} parent=1 // pred_fallthru
      _
    // Predicated region
    $region6: #{_lambda_.1} parent=1 // pred_check
      _
    $region7: #{_lambda_.1} parent=1 // pred_check_branch
      %16 = sbr.rel (0) target = $region9
    $region8: #{_lambda_.1} parent=1 // pred_region
      _
    $region9: #{_lambda_.1} parent=1 // pred_fallthru
      _
    // Predicated region
    $region10: #{_lambda_.1} parent=1 // pred_check
      _
    $region11: #{_lambda_.1} parent=1 // pred_check_branch
      %18 = sbr.rel (0) target = $region13
    $region12: #{_lambda_.1} parent=1 // pred_region
      %s20 = ssub.s32 8192, 8192
      %21 = vsyncadd [#allocation4], %s20
      %s22 = sshll.u32 [#allocation3], 4
      %s23 = int_to_ptr.vmem [resolvable:$true] %s22
      %28 = dma.hbm_to_vmem [thread:$0]  %s2, 8192, %s23, [#allocation4], 64, 64, 4
    $region13: #{_lambda_.1} parent=1 // pred_fallthru
      _
    // Predicated region
    $region14: #{_lambda_.1} parent=1 // pred_check
      _
    $region15: #{_lambda_.1} parent=1 // pred_check_branch
      %30 = sbr.rel (0) target = $region17
    $region16: #{_lambda_.1} parent=1 // pred_region
      _
    $region17: #{_lambda_.1} parent=1 // pred_fallthru
      _
    // Predicated region
    $region18: #{_lambda_.1} parent=1 // pred_check
      _
    $region19: #{_lambda_.1} parent=1 // pred_check_branch
      %32 = sbr.rel (0) target = $region21
    $region20: #{_lambda_.1} parent=1 // pred_region
      _
    $region21: #{_lambda_.1} parent=1 // pred_fallthru
      _
    // Predicated region
    $region22: #{_lambda_.1} parent=1 // pred_check
      _
    $region23: #{_lambda_.1} parent=1 // pred_check_branch
      %34 = sbr.rel (0) target = $region25
    $region24: #{_lambda_.1} parent=1 // pred_region
      _
    $region25: #{_lambda_.1} parent=1 // pred_fallthru
      _
    // Predicated region
    $region26: #{_lambda_.1} parent=1 // pred_check
      _
    $region27: #{_lambda_.1} parent=1 // pred_check_branch
      %36 = sbr.rel (0) target = $region29
    $region28: #{_lambda_.1} parent=1 // pred_region
      %37 = dma.done [#allocation4], 8192
    $region29: #{_lambda_.1} parent=1 // pred_fallthru
      _
    %v39 = vld [vmem:[%s1] sm:$0xff]
    %v40 = vld [vmem:[%s1 + $0x8] sm:$0xff]
    %v41 = vld [vmem:[%s1 + $0x10] sm:$0xff]
    %v42 = vld [vmem:[%s1 + $0x18] sm:$0xff]
    %v43 = vld [vmem:[#allocation3] sm:$0xf]
    %v44 = vld [vmem:[#allocation3 + $0x4] sm:$0xf]
    %v45 = vld [vmem:[#allocation3 + $0x8] sm:$0xf]
    %v46 = vld [vmem:[#allocation3 + $0xc] sm:$0xf]
    %v47 = vld [vmem:[#allocation3 + $0x10] sm:$0xf]
    %v48 = vld [vmem:[#allocation3 + $0x14] sm:$0xf]
    %v49 = vld [vmem:[#allocation3 + $0x18] sm:$0xf]
    %v50 = vld [vmem:[#allocation3 + $0x1c] sm:$0xf]
    %v51 = vld [vmem:[#allocation3 + $0x20] sm:$0xf]
    %v52 = vld [vmem:[#allocation3 + $0x24] sm:$0xf]
    %v53 = vld [vmem:[#allocation3 + $0x28] sm:$0xf]
    %v54 = vld [vmem:[#allocation3 + $0x2c] sm:$0xf]
    %v55 = vld [vmem:[#allocation3 + $0x30] sm:$0xf]
    %v56 = vld [vmem:[#allocation3 + $0x34] sm:$0xf]
    %v57 = vld [vmem:[#allocation3 + $0x38] sm:$0xf]
    %v58 = vld [vmem:[#allocation3 + $0x3c] sm:$0xf]
    %v59 = vld [vmem:[#allocation3 + $0x40] sm:$0xf]
    %v60 = vld [vmem:[#allocation3 + $0x44] sm:$0xf]
    %v61 = vld [vmem:[#allocation3 + $0x48] sm:$0xf]
    %v62 = vld [vmem:[#allocation3 + $0x4c] sm:$0xf]
    %v63 = vld [vmem:[#allocation3 + $0x50] sm:$0xf]
    %v64 = vld [vmem:[#allocation3 + $0x54] sm:$0xf]
    %v65 = vld [vmem:[#allocation3 + $0x58] sm:$0xf]
    %v66 = vld [vmem:[#allocation3 + $0x5c] sm:$0xf]
    %v67 = vld [vmem:[#allocation3 + $0x60] sm:$0xf]
    %v68 = vld [vmem:[#allocation3 + $0x64] sm:$0xf]
    %v69 = vld [vmem:[#allocation3 + $0x68] sm:$0xf]
    %v70 = vld [vmem:[#allocation3 + $0x6c] sm:$0xf]
    %v71 = vld [vmem:[#allocation3 + $0x70] sm:$0xf]
    %v72 = vld [vmem:[#allocation3 + $0x74] sm:$0xf]
    %v73 = vld [vmem:[#allocation3 + $0x78] sm:$0xf]
    %v74 = vld [vmem:[#allocation3 + $0x7c] sm:$0xf]
    %v75 = vld [vmem:[#allocation3 + $0x80] sm:$0xf]
    %v76 = vld [vmem:[#allocation3 + $0x84] sm:$0xf]
    %v77 = vld [vmem:[#allocation3 + $0x88] sm:$0xf]
    %v78 = vld [vmem:[#allocation3 + $0x8c] sm:$0xf]
    %v79 = vld [vmem:[#allocation3 + $0x90] sm:$0xf]
    %v80 = vld [vmem:[#allocation3 + $0x94] sm:$0xf]
    %v81 = vld [vmem:[#allocation3 + $0x98] sm:$0xf]
    %v82 = vld [vmem:[#allocation3 + $0x9c] sm:$0xf]
    %v83 = vld [vmem:[#allocation3 + $0xa0] sm:$0xf]
    %v84 = vld [vmem:[#allocation3 + $0xa4] sm:$0xf]
    %v85 = vld [vmem:[#allocation3 + $0xa8] sm:$0xf]
    %v86 = vld [vmem:[#allocation3 + $0xac] sm:$0xf]
    %v87 = vld [vmem:[#allocation3 + $0xb0] sm:$0xf]
    %v88 = vld [vmem:[#allocation3 + $0xb4] sm:$0xf]
    %v89 = vld [vmem:[#allocation3 + $0xb8] sm:$0xf]
    %v90 = vld [vmem:[#allocation3 + $0xbc] sm:$0xf]
    %v91 = vld [vmem:[#allocation3 + $0xc0] sm:$0xf]
    %v92 = vld [vmem:[#allocation3 + $0xc4] sm:$0xf]
    %v93 = vld [vmem:[#allocation3 + $0xc8] sm:$0xf]
    %v94 = vld [vmem:[#allocation3 + $0xcc] sm:$0xf]
    %v95 = vld [vmem:[#allocation3 + $0xd0] sm:$0xf]
    %v96 = vld [vmem:[#allocation3 + $0xd4] sm:$0xf]
    %v97 = vld [vmem:[#allocation3 + $0xd8] sm:$0xf]
    %v98 = vld [vmem:[#allocation3 + $0xdc] sm:$0xf]
    %v99 = vld [vmem:[#allocation3 + $0xe0] sm:$0xf]
    %v100 = vld [vmem:[#allocation3 + $0xe4] sm:$0xf]
    %v101 = vld [vmem:[#allocation3 + $0xe8] sm:$0xf]
    %v102 = vld [vmem:[#allocation3 + $0xec] sm:$0xf]
    %v103 = vld [vmem:[#allocation3 + $0xf0] sm:$0xf]
    %v104 = vld [vmem:[#allocation3 + $0xf4] sm:$0xf]
    %v105 = vld [vmem:[#allocation3 + $0xf8] sm:$0xf]
    %v106 = vld [vmem:[#allocation3 + $0xfc] sm:$0xf]
    %v107 = vld [vmem:[#allocation3 + $0x100] sm:$0xf]
    %v108 = vld [vmem:[#allocation3 + $0x104] sm:$0xf]
    %v109 = vld [vmem:[#allocation3 + $0x108] sm:$0xf]
    %v110 = vld [vmem:[#allocation3 + $0x10c] sm:$0xf]
    %v111 = vld [vmem:[#allocation3 + $0x110] sm:$0xf]
    %v112 = vld [vmem:[#allocation3 + $0x114] sm:$0xf]
    %v113 = vld [vmem:[#allocation3 + $0x118] sm:$0xf]
    %v114 = vld [vmem:[#allocation3 + $0x11c] sm:$0xf]
    %v115 = vld [vmem:[#allocation3 + $0x120] sm:$0xf]
    %v116 = vld [vmem:[#allocation3 + $0x124] sm:$0xf]
    %v117 = vld [vmem:[#allocation3 + $0x128] sm:$0xf]
    %v118 = vld [vmem:[#allocation3 + $0x12c] sm:$0xf]
    %v119 = vld [vmem:[#allocation3 + $0x130] sm:$0xf]
    %v120 = vld [vmem:[#allocation3 + $0x134] sm:$0xf]
    %v121 = vld [vmem:[#allocation3 + $0x138] sm:$0xf]
    %v122 = vld [vmem:[#allocation3 + $0x13c] sm:$0xf]
    %v123 = vld [vmem:[#allocation3 + $0x140] sm:$0xf]
    %v124 = vld [vmem:[#allocation3 + $0x144] sm:$0xf]
    %v125 = vld [vmem:[#allocation3 + $0x148] sm:$0xf]
    %v126 = vld [vmem:[#allocation3 + $0x14c] sm:$0xf]
    %v127 = vld [vmem:[#allocation3 + $0x150] sm:$0xf]
    %v128 = vld [vmem:[#allocation3 + $0x154] sm:$0xf]
    %v129 = vld [vmem:[#allocation3 + $0x158] sm:$0xf]
    %v130 = vld [vmem:[#allocation3 + $0x15c] sm:$0xf]
    %v131 = vld [vmem:[#allocation3 + $0x160] sm:$0xf]
    %v132 = vld [vmem:[#allocation3 + $0x164] sm:$0xf]
    %v133 = vld [vmem:[#allocation3 + $0x168] sm:$0xf]
    %v134 = vld [vmem:[#allocation3 + $0x16c] sm:$0xf]
    %v135 = vld [vmem:[#allocation3 + $0x170] sm:$0xf]
    %v136 = vld [vmem:[#allocation3 + $0x174] sm:$0xf]
    %v137 = vld [vmem:[#allocation3 + $0x178] sm:$0xf]
    %v138 = vld [vmem:[#allocation3 + $0x17c] sm:$0xf]
    %v139 = vld [vmem:[#allocation3 + $0x180] sm:$0xf]
    %v140 = vld [vmem:[#allocation3 + $0x184] sm:$0xf]
    %v141 = vld [vmem:[#allocation3 + $0x188] sm:$0xf]
    %v142 = vld [vmem:[#allocation3 + $0x18c] sm:$0xf]
    %v143 = vld [vmem:[#allocation3 + $0x190] sm:$0xf]
    %v144 = vld [vmem:[#allocation3 + $0x194] sm:$0xf]
    %v145 = vld [vmem:[#allocation3 + $0x198] sm:$0xf]
    %v146 = vld [vmem:[#allocation3 + $0x19c] sm:$0xf]
    %v147 = vld [vmem:[#allocation3 + $0x1a0] sm:$0xf]
    %v148 = vld [vmem:[#allocation3 + $0x1a4] sm:$0xf]
    %v149 = vld [vmem:[#allocation3 + $0x1a8] sm:$0xf]
    %v150 = vld [vmem:[#allocation3 + $0x1ac] sm:$0xf]
    %v151 = vld [vmem:[#allocation3 + $0x1b0] sm:$0xf]
    %v152 = vld [vmem:[#allocation3 + $0x1b4] sm:$0xf]
    %v153 = vld [vmem:[#allocation3 + $0x1b8] sm:$0xf]
    %v154 = vld [vmem:[#allocation3 + $0x1bc] sm:$0xf]
    %v155 = vld [vmem:[#allocation3 + $0x1c0] sm:$0xf]
    %v156 = vld [vmem:[#allocation3 + $0x1c4] sm:$0xf]
    %v157 = vld [vmem:[#allocation3 + $0x1c8] sm:$0xf]
    %v158 = vld [vmem:[#allocation3 + $0x1cc] sm:$0xf]
    %v159 = vld [vmem:[#allocation3 + $0x1d0] sm:$0xf]
    %v160 = vld [vmem:[#allocation3 + $0x1d4] sm:$0xf]
    %v161 = vld [vmem:[#allocation3 + $0x1d8] sm:$0xf]
    %v162 = vld [vmem:[#allocation3 + $0x1dc] sm:$0xf]
    %v163 = vld [vmem:[#allocation3 + $0x1e0] sm:$0xf]
    %v164 = vld [vmem:[#allocation3 + $0x1e4] sm:$0xf]
    %v165 = vld [vmem:[#allocation3 + $0x1e8] sm:$0xf]
    %v166 = vld [vmem:[#allocation3 + $0x1ec] sm:$0xf]
    %v167 = vld [vmem:[#allocation3 + $0x1f0] sm:$0xf]
    %v168 = vld [vmem:[#allocation3 + $0x1f4] sm:$0xf]
    %v169 = vld [vmem:[#allocation3 + $0x1f8] sm:$0xf]
    %v170 = vld [vmem:[#allocation3 + $0x1fc] sm:$0xf]
    %v171 = vld [vmem:[%s3] sm:$0x1]
    %v173 = vlaneseq
    %v174 = vshrl.u32 %v173, 7
    %v175 = vsub.s32 0, %v174
    %v176 = vrot.slane %v171, %v175
    %v182 = vunpack.c.l.b16 %v39
    %v183 = vunpack.c.h.b16 %v39
    %v184 = vunpack.c.l.b16 %v40
    %v185 = vunpack.c.h.b16 %v40
    %v186 = vunpack.c.l.b16 %v41
    %v187 = vunpack.c.h.b16 %v41
    %v188 = vunpack.c.l.b16 %v42
    %v189 = vunpack.c.h.b16 %v42
    %v190 = vpack.c.b16 %v182, %v182
    %v191 = vpack.c.b16 %v183, %v183
    %v192 = vpack.c.b16 %v184, %v184
    %v193 = vpack.c.b16 %v185, %v185
    %v194 = vpack.c.b16 %v186, %v186
    %v195 = vpack.c.b16 %v187, %v187
    %v196 = vpack.c.b16 %v188, %v188
    %v197 = vpack.c.b16 %v189, %v189
    %v334 = vunpack.c.l.b16 %v43
    %v335 = vunpack.c.l.b16 %v44
    %v336 = vunpack.c.l.b16 %v45
    %v337 = vunpack.c.l.b16 %v46
    %v338 = vunpack.c.l.b16 %v47
    %v339 = vunpack.c.l.b16 %v48
    %v340 = vunpack.c.l.b16 %v49
    %v341 = vunpack.c.l.b16 %v50
    %v342 = vunpack.c.l.b16 %v51
    %v343 = vunpack.c.l.b16 %v52
    %v344 = vunpack.c.l.b16 %v53
    %v345 = vunpack.c.l.b16 %v54
    %v346 = vunpack.c.l.b16 %v55
    %v347 = vunpack.c.l.b16 %v56
    %v348 = vunpack.c.l.b16 %v57
    %v349 = vunpack.c.l.b16 %v58
    %v350 = vunpack.c.l.b16 %v59
    %v351 = vunpack.c.l.b16 %v60
    %v352 = vunpack.c.l.b16 %v61
    %v353 = vunpack.c.l.b16 %v62
    %v354 = vunpack.c.l.b16 %v63
    %v355 = vunpack.c.l.b16 %v64
    %v356 = vunpack.c.l.b16 %v65
    %v357 = vunpack.c.l.b16 %v66
    %v358 = vunpack.c.l.b16 %v67
    %v359 = vunpack.c.l.b16 %v68
    %v360 = vunpack.c.l.b16 %v69
    %v361 = vunpack.c.l.b16 %v70
    %v362 = vunpack.c.l.b16 %v71
    %v363 = vunpack.c.l.b16 %v72
    %v364 = vunpack.c.l.b16 %v73
    %v365 = vunpack.c.l.b16 %v74
    %v366 = vunpack.c.l.b16 %v75
    %v367 = vunpack.c.l.b16 %v76
    %v368 = vunpack.c.l.b16 %v77
    %v369 = vunpack.c.l.b16 %v78
    %v370 = vunpack.c.l.b16 %v79
    %v371 = vunpack.c.l.b16 %v80
    %v372 = vunpack.c.l.b16 %v81
    %v373 = vunpack.c.l.b16 %v82
    %v374 = vunpack.c.l.b16 %v83
    %v375 = vunpack.c.l.b16 %v84
    %v376 = vunpack.c.l.b16 %v85
    %v377 = vunpack.c.l.b16 %v86
    %v378 = vunpack.c.l.b16 %v87
    %v379 = vunpack.c.l.b16 %v88
    %v380 = vunpack.c.l.b16 %v89
    %v381 = vunpack.c.l.b16 %v90
    %v382 = vunpack.c.l.b16 %v91
    %v383 = vunpack.c.l.b16 %v92
    %v384 = vunpack.c.l.b16 %v93
    %v385 = vunpack.c.l.b16 %v94
    %v386 = vunpack.c.l.b16 %v95
    %v387 = vunpack.c.l.b16 %v96
    %v388 = vunpack.c.l.b16 %v97
    %v389 = vunpack.c.l.b16 %v98
    %v390 = vunpack.c.l.b16 %v99
    %v391 = vunpack.c.l.b16 %v100
    %v392 = vunpack.c.l.b16 %v101
    %v393 = vunpack.c.l.b16 %v102
    %v394 = vunpack.c.l.b16 %v103
    %v395 = vunpack.c.l.b16 %v104
    %v396 = vunpack.c.l.b16 %v105
    %v397 = vunpack.c.l.b16 %v106
    %v398 = vunpack.c.l.b16 %v107
    %v399 = vunpack.c.l.b16 %v108
    %v400 = vunpack.c.l.b16 %v109
    %v401 = vunpack.c.l.b16 %v110
    %v402 = vunpack.c.l.b16 %v111
    %v403 = vunpack.c.l.b16 %v112
    %v404 = vunpack.c.l.b16 %v113
    %v405 = vunpack.c.l.b16 %v114
    %v406 = vunpack.c.l.b16 %v115
    %v407 = vunpack.c.l.b16 %v116
    %v408 = vunpack.c.l.b16 %v117
    %v409 = vunpack.c.l.b16 %v118
    %v410 = vunpack.c.l.b16 %v119
    %v411 = vunpack.c.l.b16 %v120
    %v412 = vunpack.c.l.b16 %v121
    %v413 = vunpack.c.l.b16 %v122
    %v414 = vunpack.c.l.b16 %v123
    %v415 = vunpack.c.l.b16 %v124
    %v416 = vunpack.c.l.b16 %v125
    %v417 = vunpack.c.l.b16 %v126
    %v418 = vunpack.c.l.b16 %v127
    %v419 = vunpack.c.l.b16 %v128
    %v420 = vunpack.c.l.b16 %v129
    %v421 = vunpack.c.l.b16 %v130
    %v422 = vunpack.c.l.b16 %v131
    %v423 = vunpack.c.l.b16 %v132
    %v424 = vunpack.c.l.b16 %v133
    %v425 = vunpack.c.l.b16 %v134
    %v426 = vunpack.c.l.b16 %v135
    %v427 = vunpack.c.l.b16 %v136
    %v428 = vunpack.c.l.b16 %v137
    %v429 = vunpack.c.l.b16 %v138
    %v430 = vunpack.c.l.b16 %v139
    %v431 = vunpack.c.l.b16 %v140
    %v432 = vunpack.c.l.b16 %v141
    %v433 = vunpack.c.l.b16 %v142
    %v434 = vunpack.c.l.b16 %v143
    %v435 = vunpack.c.l.b16 %v144
    %v436 = vunpack.c.l.b16 %v145
    %v437 = vunpack.c.l.b16 %v146
    %v438 = vunpack.c.l.b16 %v147
    %v439 = vunpack.c.l.b16 %v148
    %v440 = vunpack.c.l.b16 %v149
    %v441 = vunpack.c.l.b16 %v150
    %v442 = vunpack.c.l.b16 %v151
    %v443 = vunpack.c.l.b16 %v152
    %v444 = vunpack.c.l.b16 %v153
    %v445 = vunpack.c.l.b16 %v154
    %v446 = vunpack.c.l.b16 %v155
    %v447 = vunpack.c.l.b16 %v156
    %v448 = vunpack.c.l.b16 %v157
    %v449 = vunpack.c.l.b16 %v158
    %v450 = vunpack.c.l.b16 %v159
    %v451 = vunpack.c.l.b16 %v160
    %v452 = vunpack.c.l.b16 %v161
    %v453 = vunpack.c.l.b16 %v162
    %v454 = vunpack.c.l.b16 %v163
    %v455 = vunpack.c.l.b16 %v164
    %v456 = vunpack.c.l.b16 %v165
    %v457 = vunpack.c.l.b16 %v166
    %v458 = vunpack.c.l.b16 %v167
    %v459 = vunpack.c.l.b16 %v168
    %v460 = vunpack.c.l.b16 %v169
    %v461 = vunpack.c.l.b16 %v170
    %v462 = vpack.c.b16 %v335, %v334
    %v463 = vpack.c.b16 %v337, %v336
    %v464 = vpack.c.b16 %v339, %v338
    %v465 = vpack.c.b16 %v341, %v340
    %v466 = vpack.c.b16 %v343, %v342
    %v467 = vpack.c.b16 %v345, %v344
    %v468 = vpack.c.b16 %v347, %v346
    %v469 = vpack.c.b16 %v349, %v348
    %v470 = vpack.c.b16 %v351, %v350
    %v471 = vpack.c.b16 %v353, %v352
    %v472 = vpack.c.b16 %v355, %v354
    %v473 = vpack.c.b16 %v357, %v356
    %v474 = vpack.c.b16 %v359, %v358
    %v475 = vpack.c.b16 %v361, %v360
    %v476 = vpack.c.b16 %v363, %v362
    %v477 = vpack.c.b16 %v365, %v364
    %v478 = vpack.c.b16 %v367, %v366
    %v479 = vpack.c.b16 %v369, %v368
    %v480 = vpack.c.b16 %v371, %v370
    %v481 = vpack.c.b16 %v373, %v372
    %v482 = vpack.c.b16 %v375, %v374
    %v483 = vpack.c.b16 %v377, %v376
    %v484 = vpack.c.b16 %v379, %v378
    %v485 = vpack.c.b16 %v381, %v380
    %v486 = vpack.c.b16 %v383, %v382
    %v487 = vpack.c.b16 %v385, %v384
    %v488 = vpack.c.b16 %v387, %v386
    %v489 = vpack.c.b16 %v389, %v388
    %v490 = vpack.c.b16 %v391, %v390
    %v491 = vpack.c.b16 %v393, %v392
    %v492 = vpack.c.b16 %v395, %v394
    %v493 = vpack.c.b16 %v397, %v396
    %v494 = vpack.c.b16 %v399, %v398
    %v495 = vpack.c.b16 %v401, %v400
    %v496 = vpack.c.b16 %v403, %v402
    %v497 = vpack.c.b16 %v405, %v404
    %v498 = vpack.c.b16 %v407, %v406
    %v499 = vpack.c.b16 %v409, %v408
    %v500 = vpack.c.b16 %v411, %v410
    %v501 = vpack.c.b16 %v413, %v412
    %v502 = vpack.c.b16 %v415, %v414
    %v503 = vpack.c.b16 %v417, %v416
    %v504 = vpack.c.b16 %v419, %v418
    %v505 = vpack.c.b16 %v421, %v420
    %v506 = vpack.c.b16 %v423, %v422
    %v507 = vpack.c.b16 %v425, %v424
    %v508 = vpack.c.b16 %v427, %v426
    %v509 = vpack.c.b16 %v429, %v428
    %v510 = vpack.c.b16 %v431, %v430
    %v511 = vpack.c.b16 %v433, %v432
    %v512 = vpack.c.b16 %v435, %v434
    %v513 = vpack.c.b16 %v437, %v436
    %v514 = vpack.c.b16 %v439, %v438
    %v515 = vpack.c.b16 %v441, %v440
    %v516 = vpack.c.b16 %v443, %v442
    %v517 = vpack.c.b16 %v445, %v444
    %v518 = vpack.c.b16 %v447, %v446
    %v519 = vpack.c.b16 %v449, %v448
    %v520 = vpack.c.b16 %v451, %v450
    %v521 = vpack.c.b16 %v453, %v452
    %v522 = vpack.c.b16 %v455, %v454
    %v523 = vpack.c.b16 %v457, %v456
    %v524 = vpack.c.b16 %v459, %v458
    %v525 = vpack.c.b16 %v461, %v460
    %590 = vmatprep.subr.bf16.mxu0 0
    %591 = vmatpush1.bf16.msra.mxu0 %v469
    %592 = vmatprep.subr.bf16.mxu0 0
    %593 = vmatpush1.bf16.msra.mxu0 %v468
    %594 = vmatprep.subr.bf16.mxu0 0
    %595 = vmatpush1.bf16.msra.mxu0 %v467
    %596 = vmatprep.subr.bf16.mxu0 0
    %597 = vmatpush1.bf16.msra.mxu0 %v466
    %598 = vmatprep.subr.bf16.mxu0 0
    %599 = vmatpush1.bf16.msra.mxu0 %v465
    %600 = vmatprep.subr.bf16.mxu0 0
    %601 = vmatpush1.bf16.msra.mxu0 %v464
    %602 = vmatprep.subr.bf16.mxu0 0
    %603 = vmatpush1.bf16.msra.mxu0 %v463
    %604 = vmatprep.subr.bf16.mxu0 0
    %605 = vmatpush1.bf16.msra.mxu0 %v462
    %606 = vmatprep.subr.bf16.mxu0 0
    %607 = vmatpush2.bf16.msra.mxu0 %v477
    %608 = vmatprep.subr.bf16.mxu0 0
    %609 = vmatpush2.bf16.msra.mxu0 %v476
    %610 = vmatprep.subr.bf16.mxu0 0
    %611 = vmatpush2.bf16.msra.mxu0 %v475
    %612 = vmatprep.subr.bf16.mxu0 0
    %613 = vmatpush2.bf16.msra.mxu0 %v474
    %614 = vmatprep.subr.bf16.mxu0 0
    %615 = vmatpush2.bf16.msra.mxu0 %v473
    %616 = vmatprep.subr.bf16.mxu0 0
    %617 = vmatpush2.bf16.msra.mxu0 %v472
    %618 = vmatprep.subr.bf16.mxu0 0
    %619 = vmatpush2.bf16.msra.mxu0 %v471
    %620 = vmatprep.subr.bf16.mxu0 0
    %621 = vmatpush2.bf16.msra.mxu0 %v470
    %622 = vmatprep.mubr.bf16.mxu0 %v191
    %623 = vmatmul.mubr.bf16.gmra.mxu0 %v190
    %v624 = vpop.f32.mrf.mxu0
    %v625 = vadd.f32 %v176, %v624
    %v626 = vpop.f32.mrf.mxu0
    %v627 = vpop.f32.mrf.mxu0
    %v628 = vpop.f32.mrf.mxu0
    %629 = vdwg.mxu0
    %630 = vmatprep.subr.bf16.mxu0 0
    %631 = vmatpush1.bf16.msra.mxu0 %v485
    %632 = vmatprep.subr.bf16.mxu0 0
    %633 = vmatpush1.bf16.msra.mxu0 %v484
    %634 = vmatprep.subr.bf16.mxu0 0
    %635 = vmatpush1.bf16.msra.mxu0 %v483
    %636 = vmatprep.subr.bf16.mxu0 0
    %637 = vmatpush1.bf16.msra.mxu0 %v482
    %638 = vmatprep.subr.bf16.mxu0 0
    %639 = vmatpush1.bf16.msra.mxu0 %v481
    %640 = vmatprep.subr.bf16.mxu0 0
    %641 = vmatpush1.bf16.msra.mxu0 %v480
    %642 = vmatprep.subr.bf16.mxu0 0
    %643 = vmatpush1.bf16.msra.mxu0 %v479
    %644 = vmatprep.subr.bf16.mxu0 0
    %645 = vmatpush1.bf16.msra.mxu0 %v478
    %646 = vmatprep.subr.bf16.mxu0 0
    %647 = vmatpush2.bf16.msra.mxu0 %v493
    %648 = vmatprep.subr.bf16.mxu0 0
    %649 = vmatpush2.bf16.msra.mxu0 %v492
    %650 = vmatprep.subr.bf16.mxu0 0
    %651 = vmatpush2.bf16.msra.mxu0 %v491
    %652 = vmatprep.subr.bf16.mxu0 0
    %653 = vmatpush2.bf16.msra.mxu0 %v490
    %654 = vmatprep.subr.bf16.mxu0 0
    %655 = vmatpush2.bf16.msra.mxu0 %v489
    %656 = vmatprep.subr.bf16.mxu0 0
    %657 = vmatpush2.bf16.msra.mxu0 %v488
    %658 = vmatprep.subr.bf16.mxu0 0
    %659 = vmatpush2.bf16.msra.mxu0 %v487
    %660 = vmatprep.subr.bf16.mxu0 0
    %661 = vmatpush2.bf16.msra.mxu0 %v486
    %662 = vmatprep.mubr.bf16.mxu0 %v193
    %663 = vmatmul.mubr.bf16.gmra.mxu0 %v192
    %v664 = vpop.f32.mrf.mxu0
    %v665 = vadd.f32 %v625, %v664
    %v666 = vpop.f32.mrf.mxu0
    %v667 = vpop.f32.mrf.mxu0
    %v668 = vpop.f32.mrf.mxu0
    %669 = vdwg.mxu0
    %670 = vmatprep.subr.bf16.mxu0 0
    %671 = vmatpush1.bf16.msra.mxu0 %v501
    %672 = vmatprep.subr.bf16.mxu0 0
    %673 = vmatpush1.bf16.msra.mxu0 %v500
    %674 = vmatprep.subr.bf16.mxu0 0
    %675 = vmatpush1.bf16.msra.mxu0 %v499
    %676 = vmatprep.subr.bf16.mxu0 0
    %677 = vmatpush1.bf16.msra.mxu0 %v498
    %678 = vmatprep.subr.bf16.mxu0 0
    %679 = vmatpush1.bf16.msra.mxu0 %v497
    %680 = vmatprep.subr.bf16.mxu0 0
    %681 = vmatpush1.bf16.msra.mxu0 %v496
    %682 = vmatprep.subr.bf16.mxu0 0
    %683 = vmatpush1.bf16.msra.mxu0 %v495
    %684 = vmatprep.subr.bf16.mxu0 0
    %685 = vmatpush1.bf16.msra.mxu0 %v494
    %686 = vmatprep.subr.bf16.mxu0 0
    %687 = vmatpush2.bf16.msra.mxu0 %v509
    %688 = vmatprep.subr.bf16.mxu0 0
    %689 = vmatpush2.bf16.msra.mxu0 %v508
    %690 = vmatprep.subr.bf16.mxu0 0
    %691 = vmatpush2.bf16.msra.mxu0 %v507
    %692 = vmatprep.subr.bf16.mxu0 0
    %693 = vmatpush2.bf16.msra.mxu0 %v506
    %694 = vmatprep.subr.bf16.mxu0 0
    %695 = vmatpush2.bf16.msra.mxu0 %v505
    %696 = vmatprep.subr.bf16.mxu0 0
    %697 = vmatpush2.bf16.msra.mxu0 %v504
    %698 = vmatprep.subr.bf16.mxu0 0
    %699 = vmatpush2.bf16.msra.mxu0 %v503
    %700 = vmatprep.subr.bf16.mxu0 0
    %701 = vmatpush2.bf16.msra.mxu0 %v502
    %702 = vmatprep.mubr.bf16.mxu0 %v195
    %703 = vmatmul.mubr.bf16.gmra.mxu0 %v194
    %v704 = vpop.f32.mrf.mxu0
    %v705 = vadd.f32 %v665, %v704
    %v706 = vpop.f32.mrf.mxu0
    %v707 = vpop.f32.mrf.mxu0
    %v708 = vpop.f32.mrf.mxu0
    %709 = vdwg.mxu0
    %710 = vmatprep.subr.bf16.mxu0 0
    %711 = vmatpush1.bf16.msra.mxu0 %v517
    %712 = vmatprep.subr.bf16.mxu0 0
    %713 = vmatpush1.bf16.msra.mxu0 %v516
    %714 = vmatprep.subr.bf16.mxu0 0
    %715 = vmatpush1.bf16.msra.mxu0 %v515
    %716 = vmatprep.subr.bf16.mxu0 0
    %717 = vmatpush1.bf16.msra.mxu0 %v514
    %718 = vmatprep.subr.bf16.mxu0 0
    %719 = vmatpush1.bf16.msra.mxu0 %v513
    %720 = vmatprep.subr.bf16.mxu0 0
    %721 = vmatpush1.bf16.msra.mxu0 %v512
    %722 = vmatprep.subr.bf16.mxu0 0
    %723 = vmatpush1.bf16.msra.mxu0 %v511
    %724 = vmatprep.subr.bf16.mxu0 0
    %725 = vmatpush1.bf16.msra.mxu0 %v510
    %726 = vmatprep.subr.bf16.mxu0 0
    %727 = vmatpush2.bf16.msra.mxu0 %v525
    %728 = vmatprep.subr.bf16.mxu0 0
    %729 = vmatpush2.bf16.msra.mxu0 %v524
    %730 = vmatprep.subr.bf16.mxu0 0
    %731 = vmatpush2.bf16.msra.mxu0 %v523
    %732 = vmatprep.subr.bf16.mxu0 0
    %733 = vmatpush2.bf16.msra.mxu0 %v522
    %734 = vmatprep.subr.bf16.mxu0 0
    %735 = vmatpush2.bf16.msra.mxu0 %v521
    %736 = vmatprep.subr.bf16.mxu0 0
    %737 = vmatpush2.bf16.msra.mxu0 %v520
    %738 = vmatprep.subr.bf16.mxu0 0
    %739 = vmatpush2.bf16.msra.mxu0 %v519
    %740 = vmatprep.subr.bf16.mxu0 0
    %741 = vmatpush2.bf16.msra.mxu0 %v518
    %742 = vmatprep.mubr.bf16.mxu0 %v197
    %743 = vmatmul.mubr.bf16.gmra.mxu0 %v196
    %v744 = vpop.f32.mrf.mxu0
    %v745 = vadd.f32 %v705, %v744
    %v746 = vpop.f32.mrf.mxu0
    %v747 = vpop.f32.mrf.mxu0
    %v748 = vpop.f32.mrf.mxu0
    %749 = vdwg.mxu0
    %v750 = vmax.f32 %v745, 0.0
    %v751 = vpack.c.bf16 %v750, %v750
    %v752 = vld [vmem:[%s4] sm:$0xf]
    %v753 = vld [vmem:[%s4 + $0x4] sm:$0xf]
    %v754 = vld [vmem:[%s4 + $0x8] sm:$0xf]
    %v755 = vld [vmem:[%s4 + $0xc] sm:$0xf]
    %v756 = vld [vmem:[%s4 + $0x10] sm:$0xf]
    %v757 = vld [vmem:[%s4 + $0x14] sm:$0xf]
    %v758 = vld [vmem:[%s4 + $0x18] sm:$0xf]
    %v759 = vld [vmem:[%s4 + $0x1c] sm:$0xf]
    %v760 = vld [vmem:[%s4 + $0x20] sm:$0xf]
    %v761 = vld [vmem:[%s4 + $0x24] sm:$0xf]
    %v762 = vld [vmem:[%s4 + $0x28] sm:$0xf]
    %v763 = vld [vmem:[%s4 + $0x2c] sm:$0xf]
    %v764 = vld [vmem:[%s4 + $0x30] sm:$0xf]
    %v765 = vld [vmem:[%s4 + $0x34] sm:$0xf]
    %v766 = vld [vmem:[%s4 + $0x38] sm:$0xf]
    %v767 = vld [vmem:[%s4 + $0x3c] sm:$0xf]
    %v768 = vld [vmem:[%s5] sm:$0x1]
    %v770 = vlaneseq
    %v771 = vshrl.u32 %v770, 7
    %v772 = vsub.s32 0, %v771
    %v773 = vrot.slane %v768, %v772
    %v791 = vunpack.c.l.b16 %v752
    %v792 = vunpack.c.l.b16 %v753
    %v793 = vunpack.c.l.b16 %v754
    %v794 = vunpack.c.l.b16 %v755
    %v795 = vunpack.c.l.b16 %v756
    %v796 = vunpack.c.l.b16 %v757
    %v797 = vunpack.c.l.b16 %v758
    %v798 = vunpack.c.l.b16 %v759
    %v799 = vunpack.c.l.b16 %v760
    %v800 = vunpack.c.l.b16 %v761
    %v801 = vunpack.c.l.b16 %v762
    %v802 = vunpack.c.l.b16 %v763
    %v803 = vunpack.c.l.b16 %v764
    %v804 = vunpack.c.l.b16 %v765
    %v805 = vunpack.c.l.b16 %v766
    %v806 = vunpack.c.l.b16 %v767
    %v807 = vpack.c.b16 %v792, %v791
    %v808 = vpack.c.b16 %v794, %v793
    %v809 = vpack.c.b16 %v796, %v795
    %v810 = vpack.c.b16 %v798, %v797
    %v811 = vpack.c.b16 %v800, %v799
    %v812 = vpack.c.b16 %v802, %v801
    %v813 = vpack.c.b16 %v804, %v803
    %v814 = vpack.c.b16 %v806, %v805
    %823 = vmatprep.subr.bf16.mxu0 0
    %824 = vmatpush1.bf16.msra.mxu0 %v814
    %825 = vmatprep.subr.bf16.mxu0 0
    %826 = vmatpush1.bf16.msra.mxu0 %v813
    %827 = vmatprep.subr.bf16.mxu0 0
    %828 = vmatpush1.bf16.msra.mxu0 %v812
    %829 = vmatprep.subr.bf16.mxu0 0
    %830 = vmatpush1.bf16.msra.mxu0 %v811
    %831 = vmatprep.subr.bf16.mxu0 0
    %832 = vmatpush1.bf16.msra.mxu0 %v810
    %833 = vmatprep.subr.bf16.mxu0 0
    %834 = vmatpush1.bf16.msra.mxu0 %v809
    %835 = vmatprep.subr.bf16.mxu0 0
    %836 = vmatpush1.bf16.msra.mxu0 %v808
    %837 = vmatprep.subr.bf16.mxu0 0
    %838 = vmatpush1.bf16.msra.mxu0 %v807
    %839 = vmatprep.subr.bf16.mxu0 0
    %840 = vmatpush2.bf16.msra.mxu0 0
    %841 = vmatprep.subr.bf16.mxu0 0
    %842 = vmatpush2.bf16.msra.mxu0 0
    %843 = vmatprep.subr.bf16.mxu0 0
    %844 = vmatpush2.bf16.msra.mxu0 0
    %845 = vmatprep.subr.bf16.mxu0 0
    %846 = vmatpush2.bf16.msra.mxu0 0
    %847 = vmatprep.subr.bf16.mxu0 0
    %848 = vmatpush2.bf16.msra.mxu0 0
    %849 = vmatprep.subr.bf16.mxu0 0
    %850 = vmatpush2.bf16.msra.mxu0 0
    %851 = vmatprep.subr.bf16.mxu0 0
    %852 = vmatpush2.bf16.msra.mxu0 0
    %853 = vmatprep.subr.bf16.mxu0 0
    %854 = vmatpush2.bf16.msra.mxu0 0
    %855 = vmatprep.mubr.bf16.mxu0 0
    %856 = vmatmul.mubr.bf16.gmra.mxu0 %v751
    %v857 = vpop.f32.mrf.mxu0
    %v858 = vadd.f32 %v773, %v857
    %v859 = vpop.f32.mrf.mxu0
    %v860 = vpop.f32.mrf.mxu0
    %v861 = vpop.f32.mrf.mxu0
    %862 = vdwg.mxu0
    %v863 = vlaneseq
    %v864 = vand.u32 %v863, 127
    %vm865 = vcmp.lt.s32.totalorder %v864, 10
    %v866 = vsel %vm865, %v858, -inf
    %867 = vmax.xlane.f32.xlu0 %v866
    %v868 = vpop.xlane.xlu0 %867
    %v869 = vsub.f32 %v866, %v868
    %v870 = vmul.f32 %v869, 1.442695
    %v871 = vpow.pop %v870
    %872 = vadd.xlane.f32.xlu0 %v871
    %v873 = vpop.xlane.xlu0 %872
    %v874 = vrcp.pop %v873
    %v875 = vmul.f32 %v871, %v874
    %876 = vst [vmem:[%s6] sm:$0xff] %v875
    // Predicated region
    $region30: #{_lambda_.1} parent=1 // pred_check
      _
    $region31: #{_lambda_.1} parent=1 // pred_check_branch
      %878 = sbr.rel (0) target = $region33
    $region32: #{_lambda_.1} parent=1 // pred_region
      _
    $region33: #{_lambda_.1} parent=1 // pred_fallthru
      _
    // Predicated region
    $region34: #{_lambda_.1} parent=1 // pred_check
      _
    $region35: #{_lambda_.1} parent=1 // pred_check_branch
      %880 = sbr.rel (0) target = $region37
    $region36: #{_lambda_.1} parent=1 // pred_region
      _
    $region37: #{_lambda_.1} parent=1 // pred_fallthru
      _
    %881 = vsyncpa [#allocation4], 1

</llo_original>
